<compile_context>
chip_gen: v6e
topology: v6e:2x2x1
jax: 0.10.0
libtpu: 0.0.40
codegen_flags: <defaults>
</compile_context>

<pallas_src>
import jax
import jax.numpy as jnp
from jax.experimental import pallas as pl
from jax.experimental.pallas import tpu as pltpu

LANE = 128
SUBLANE = 8


def _round_up(n, m):
    return ((n + m - 1) // m) * m


def dqn_mlp_kernel(x_ref,
                   w0_ref, b0_ref,
                   w1_ref, b1_ref,
                   w2_ref, b2_ref,
                   w3_ref, b3_ref,
                   q_ref):
    """Full MLP chain for one batch tile, entirely in VMEM.

    Layer chain (matches nn.Sequential above):
      Linear0 -> Linear1 -> ReLU -> Linear2 -> ReLU -> Linear3(out=n_actions)
    Matmuls run bf16 x bf16 -> f32 on the MXU; bias adds / ReLU on the VPU in f32.
    Final store is a narrow (tb, n_actions) f32 block (logical columns only).
    """
    # x arrives in its native dtype (f32), unpadded along D; cast on the VPU.
    x = x_ref[...].astype(jnp.bfloat16)

    h = jnp.dot(x, w0_ref[...],
                preferred_element_type=jnp.float32) + b0_ref[...]

    h = jnp.dot(h.astype(jnp.bfloat16), w1_ref[...],
                preferred_element_type=jnp.float32) + b1_ref[...]
    h = jnp.maximum(h, 0.0)

    h = jnp.dot(h.astype(jnp.bfloat16), w2_ref[...],
                preferred_element_type=jnp.float32) + b2_ref[...]
    h = jnp.maximum(h, 0.0)

    q_ref[...] = jnp.dot(h.astype(jnp.bfloat16), w3_ref[...],
                         preferred_element_type=jnp.float32) + b3_ref[...]


def dqn_forward(x, padded_params, n_actions, *, batch_tile=None):
    """Tiles over the batch axis; weights stay fully resident in VMEM.

    Returns (qvalues [B, n_actions] f32, greedy_actions [B] int32).
    """
    B, D = x.shape
    (w0, b0), (w1, b1), (w2, b2), (w3, b3) = padded_params
    assert w0.shape[0] == D, "first-layer weight must match the native state dim"
    assert w3.shape[1] == n_actions, "last-layer weight keeps the logical action dim"

    if batch_tile is None:
        # Small batches -> one grid step (tb = Bp); large batches -> 512-row tiles
        # so per-step overhead (~0.35 us) is amortized over plenty of HBM bytes.
        batch_tile = min(_round_up(B, SUBLANE), 512)
    tb = batch_tile
    assert tb % SUBLANE == 0, "batch_tile must be a multiple of 8 (sublane rule)"
    Bp = _round_up(B, tb)
    grid = (Bp // tb,)

    # Only pad the batch axis (and only when needed); x keeps its native dtype/width.
    xp = x if Bp == B else jnp.pad(x, ((0, Bp - B), (0, 0)))

    def const2d(shape):
        # grid-invariant block: same (0, 0) block index every step -> no re-DMA
        return pl.BlockSpec(shape, lambda i: (0, 0))

    q_pad = pl.pallas_call(
        dqn_mlp_kernel,
        out_shape=jax.ShapeDtypeStruct((Bp, n_actions), jnp.float32),
        grid=grid,
        in_specs=[
            pl.BlockSpec((tb, D), lambda i: (i, 0)),   # x tile, D = full array dim
            const2d(w0.shape), const2d(b0.shape),
            const2d(w1.shape), const2d(b1.shape),
            const2d(w2.shape), const2d(b2.shape),
            const2d(w3.shape), const2d(b3.shape),
        ],
        out_specs=pl.BlockSpec((tb, n_actions), lambda i: (i, 0)),  # narrow Q block
        compiler_params=pltpu.CompilerParams(
            dimension_semantics=("parallel",),
        ),
    )(xp, w0, b0, w1, b1, w2, b2, w3, b3)

    q = q_pad[:B]
    greedy = jnp.argmax(q, axis=-1).astype(jnp.int32)
    return q, greedy


def make_params(key, dims):
    """Deterministic PyTorch-style init: W[out,in] ~ U(-1/sqrt(in), 1/sqrt(in)),
    transposed to [in, out]. Biases kept 2-D (1, out). All logical-size, f32."""
    params = []
    for d_in, d_out in dims:
        key, kw, kb = jax.random.split(key, 3)
        bound = 1.0 / jnp.sqrt(d_in)
        w_oi = jax.random.uniform(kw, (d_out, d_in), jnp.float32, -bound, bound)
        b = jax.random.uniform(kb, (1, d_out), jnp.float32, -bound, bound)
        params.append((w_oi.T, b))
    return params


def pad_params(params):
    """Zero-pad hidden dims to multiples of 128 and cast weights to bf16; biases
    zero-padded but kept f32.  The first layer's INPUT dim stays at the native
    state dim (x is streamed unpadded) and the last layer's OUTPUT dim stays at
    n_actions (narrow Q writeback).  Padded rows/cols are exactly zero so padded
    activations stay zero and the logical Q values are unaffected."""
    n = len(params)
    padded = []
    for idx, (w, b) in enumerate(params):
        din, dout = w.shape
        dinp = din if idx == 0 else _round_up(din, LANE)
        doutp = dout if idx == n - 1 else _round_up(dout, LANE)
        wp = (jnp.zeros((dinp, doutp), jnp.bfloat16)
              .at[:din, :dout].set(w.astype(jnp.bfloat16)))
        bp = jnp.zeros((1, doutp), jnp.float32).at[:, :dout].set(b)
        padded.append((wp, bp))
    return padded


def reference_forward(x, params):
    (w0, b0), (w1, b1), (w2, b2), (w3, b3) = params
    h = x @ w0 + b0
    h = jnp.maximum(h @ w1 + b1, 0.0)
    h = jnp.maximum(h @ w2 + b2, 0.0)
    return h @ w3 + b3


if __name__ == "__main__":
    # Shapes consistent with the module:
    #   state_shape = (B, D) -> first Linear in_features = state_shape[1] = D
    #   layers_lst  = [Linear(H0,H1), ReLU, Linear(H1,H2), ReLU]
    #   n_actions   = 8
    # B=64 is small, so the default tiling collapses to a single grid step.
    B, D = 64, 32
    H0, H1, H2 = 32, 64, 32
    N_ACTIONS = 8

    key = jax.random.PRNGKey(0)
    key, kx = jax.random.split(key)
    x = jax.random.normal(kx, (B, D), jnp.float32)

    params = make_params(key, [(D, H0), (H0, H1), (H1, H2), (H2, N_ACTIONS)])
    padded = pad_params(params)

    q, greedy = dqn_forward(x, padded, N_ACTIONS)
    q = jax.block_until_ready(q)
    greedy = jax.block_until_ready(greedy)

    q_ref = reference_forward(x, params)  # pure-f32 reference
    assert q.shape == (B, N_ACTIONS)
    assert greedy.shape == (B,)
    # bf16 operands / f32 accumulation -> loose tolerance vs pure-f32 reference.
    assert jnp.allclose(q, q_ref, atol=5e-2, rtol=5e-2), \
        float(jnp.max(jnp.abs(q - q_ref)))
    # Greedy action must match argmax of the Q matrix the kernel emitted.
    # (Tie-breaks on bf16-rounded Q may differ from a pure-f32 torch forward.)
    assert jnp.array_equal(greedy, jnp.argmax(q, axis=-1))

    # TODO(synk): epsilon-greedy exploration mixing (np.random.choice host glue in
    # sample_actions) stays outside the kernel; greedy actions come from the wrapper argmax.
    print("KERNEL_OK")
</pallas_src>

<mosaic_0001>
module attributes {stable_mosaic.version = 11 : i64} {
  func.func @dqn_mlp_kernel(%arg0: i32, %arg1: memref<64x32xf32, #tpu.memory_space<vmem>>, %arg2: memref<32x128xbf16, #tpu.memory_space<vmem>>, %arg3: memref<1x128xf32, #tpu.memory_space<vmem>>, %arg4: memref<128x128xbf16, #tpu.memory_space<vmem>>, %arg5: memref<1x128xf32, #tpu.memory_space<vmem>>, %arg6: memref<128x128xbf16, #tpu.memory_space<vmem>>, %arg7: memref<1x128xf32, #tpu.memory_space<vmem>>, %arg8: memref<128x8xbf16, #tpu.memory_space<vmem>>, %arg9: memref<1x8xf32, #tpu.memory_space<vmem>>, %arg10: memref<64x8xf32, #tpu.memory_space<vmem>>) attributes {dimension_semantics = [#tpu.dimension_semantics<parallel>], iteration_bounds = array<i64: 1>, scalar_prefetch = 0 : i64, scratch_operands = 0 : i64, tpu.core_type = #tpu.core_type<tc>, window_params = [{transform_indices = @transform_0, window_bounds = array<i64: 64, 32>}, {pipeline_mode = #tpu.pipeline_mode<synchronous>, transform_indices = @transform_1, window_bounds = array<i64: 32, 128>}, {pipeline_mode = #tpu.pipeline_mode<synchronous>, transform_indices = @transform_2, window_bounds = array<i64: 1, 128>}, {pipeline_mode = #tpu.pipeline_mode<synchronous>, transform_indices = @transform_3, window_bounds = array<i64: 128, 128>}, {pipeline_mode = #tpu.pipeline_mode<synchronous>, transform_indices = @transform_4, window_bounds = array<i64: 1, 128>}, {pipeline_mode = #tpu.pipeline_mode<synchronous>, transform_indices = @transform_5, window_bounds = array<i64: 128, 128>}, {pipeline_mode = #tpu.pipeline_mode<synchronous>, transform_indices = @transform_6, window_bounds = array<i64: 1, 128>}, {pipeline_mode = #tpu.pipeline_mode<synchronous>, transform_indices = @transform_7, window_bounds = array<i64: 128, 8>}, {pipeline_mode = #tpu.pipeline_mode<synchronous>, transform_indices = @transform_8, window_bounds = array<i64: 1, 8>}, {transform_indices = @transform_9, window_bounds = array<i64: 64, 8>}]} {
    %c0 = arith.constant 0 : index
    %c0_0 = arith.constant 0 : index
    %0 = vector.load %arg1[%c0, %c0_0] : memref<64x32xf32, #tpu.memory_space<vmem>>, vector<64x32xf32>
    %1 = arith.truncf %0 : vector<64x32xf32> to vector<64x32xbf16>
    %c0_1 = arith.constant 0 : index
    %c0_2 = arith.constant 0 : index
    %2 = vector.load %arg2[%c0_1, %c0_2] : memref<32x128xbf16, #tpu.memory_space<vmem>>, vector<32x128xbf16>
    %cst = arith.constant dense<0.000000e+00> : vector<64x128xf32>
    %3 = tpu.matmul %1, %2, %cst {dimension_numbers = #tpu.dot_dimension_numbers<[1], [0], [0], [1], [0, 0, 1, 1], [], []>} : vector<64x32xbf16>, vector<32x128xbf16>, vector<64x128xf32> -> vector<64x128xf32>
    %c0_3 = arith.constant 0 : index
    %c0_4 = arith.constant 0 : index
    %4 = vector.load %arg3[%c0_3, %c0_4] : memref<1x128xf32, #tpu.memory_space<vmem>>, vector<1x128xf32>
    %5 = vector.broadcast %4 : vector<1x128xf32> to vector<64x128xf32>
    %6 = arith.addf %3, %5 : vector<64x128xf32>
    %7 = arith.truncf %6 : vector<64x128xf32> to vector<64x128xbf16>
    %c0_5 = arith.constant 0 : index
    %c0_6 = arith.constant 0 : index
    %8 = vector.load %arg4[%c0_5, %c0_6] : memref<128x128xbf16, #tpu.memory_space<vmem>>, vector<128x128xbf16>
    %cst_7 = arith.constant dense<0.000000e+00> : vector<64x128xf32>
    %9 = tpu.matmul %7, %8, %cst_7 {dimension_numbers = #tpu.dot_dimension_numbers<[1], [0], [0], [1], [0, 0, 1, 1], [], []>} : vector<64x128xbf16>, vector<128x128xbf16>, vector<64x128xf32> -> vector<64x128xf32>
    %c0_8 = arith.constant 0 : index
    %c0_9 = arith.constant 0 : index
    %10 = vector.load %arg5[%c0_8, %c0_9] : memref<1x128xf32, #tpu.memory_space<vmem>>, vector<1x128xf32>
    %11 = vector.broadcast %10 : vector<1x128xf32> to vector<64x128xf32>
    %12 = arith.addf %9, %11 : vector<64x128xf32>
    %cst_10 = arith.constant 0.000000e+00 : f32
    %13 = vector.broadcast %cst_10 : f32 to vector<64x128xf32>
    %14 = arith.maximumf %12, %13 : vector<64x128xf32>
    %15 = arith.truncf %14 : vector<64x128xf32> to vector<64x128xbf16>
    %c0_11 = arith.constant 0 : index
    %c0_12 = arith.constant 0 : index
    %16 = vector.load %arg6[%c0_11, %c0_12] : memref<128x128xbf16, #tpu.memory_space<vmem>>, vector<128x128xbf16>
    %cst_13 = arith.constant dense<0.000000e+00> : vector<64x128xf32>
    %17 = tpu.matmul %15, %16, %cst_13 {dimension_numbers = #tpu.dot_dimension_numbers<[1], [0], [0], [1], [0, 0, 1, 1], [], []>} : vector<64x128xbf16>, vector<128x128xbf16>, vector<64x128xf32> -> vector<64x128xf32>
    %c0_14 = arith.constant 0 : index
    %c0_15 = arith.constant 0 : index
    %18 = vector.load %arg7[%c0_14, %c0_15] : memref<1x128xf32, #tpu.memory_space<vmem>>, vector<1x128xf32>
    %19 = vector.broadcast %18 : vector<1x128xf32> to vector<64x128xf32>
    %20 = arith.addf %17, %19 : vector<64x128xf32>
    %cst_16 = arith.constant 0.000000e+00 : f32
    %21 = vector.broadcast %cst_16 : f32 to vector<64x128xf32>
    %22 = arith.maximumf %20, %21 : vector<64x128xf32>
    %23 = arith.truncf %22 : vector<64x128xf32> to vector<64x128xbf16>
    %c0_17 = arith.constant 0 : index
    %c0_18 = arith.constant 0 : index
    %24 = vector.load %arg8[%c0_17, %c0_18] : memref<128x8xbf16, #tpu.memory_space<vmem>>, vector<128x8xbf16>
    %cst_19 = arith.constant dense<0.000000e+00> : vector<64x8xf32>
    %25 = tpu.matmul %23, %24, %cst_19 {dimension_numbers = #tpu.dot_dimension_numbers<[1], [0], [0], [1], [0, 0, 1, 1], [], []>} : vector<64x128xbf16>, vector<128x8xbf16>, vector<64x8xf32> -> vector<64x8xf32>
    %c0_20 = arith.constant 0 : index
    %c0_21 = arith.constant 0 : index
    %26 = vector.load %arg9[%c0_20, %c0_21] : memref<1x8xf32, #tpu.memory_space<vmem>>, vector<1x8xf32>
    %27 = vector.broadcast %26 : vector<1x8xf32> to vector<64x8xf32>
    %28 = arith.addf %25, %27 : vector<64x8xf32>
    %c0_22 = arith.constant 0 : index
    %c0_23 = arith.constant 0 : index
    %29 = vector.load %arg10[%c0_22, %c0_23] : memref<64x8xf32, #tpu.memory_space<vmem>>, vector<64x8xf32>
    tpu.vector_store %arg10[%c0_22, %c0_23], %28 {strides = array<i32>} : memref<64x8xf32, #tpu.memory_space<vmem>>, vector<64x8xf32>,
    return
  }
  func.func @transform_0(%arg0: i32) -> (i32, i32) {
    %c0_i32 = arith.constant 0 : i32
    %c0_i32_0 = arith.constant 0 : i32
    return %arg0, %c0_i32 : i32, i32
  }
  func.func @transform_1(%arg0: i32) -> (i32, i32) {
    %c0_i32 = arith.constant 0 : i32
    %c0_i32_0 = arith.constant 0 : i32
    %c0_i32_1 = arith.constant 0 : i32
    return %c0_i32, %c0_i32_0 : i32, i32
  }
  func.func @transform_2(%arg0: i32) -> (i32, i32) {
    %c0_i32 = arith.constant 0 : i32
    %c0_i32_0 = arith.constant 0 : i32
    %c0_i32_1 = arith.constant 0 : i32
    return %c0_i32, %c0_i32_0 : i32, i32
  }
  func.func @transform_3(%arg0: i32) -> (i32, i32) {
    %c0_i32 = arith.constant 0 : i32
    %c0_i32_0 = arith.constant 0 : i32
    %c0_i32_1 = arith.constant 0 : i32
    return %c0_i32, %c0_i32_0 : i32, i32
  }
  func.func @transform_4(%arg0: i32) -> (i32, i32) {
    %c0_i32 = arith.constant 0 : i32
    %c0_i32_0 = arith.constant 0 : i32
    %c0_i32_1 = arith.constant 0 : i32
    return %c0_i32, %c0_i32_0 : i32, i32
  }
  func.func @transform_5(%arg0: i32) -> (i32, i32) {
    %c0_i32 = arith.constant 0 : i32
    %c0_i32_0 = arith.constant 0 : i32
    %c0_i32_1 = arith.constant 0 : i32
    return %c0_i32, %c0_i32_0 : i32, i32
  }
  func.func @transform_6(%arg0: i32) -> (i32, i32) {
    %c0_i32 = arith.constant 0 : i32
    %c0_i32_0 = arith.constant 0 : i32
    %c0_i32_1 = arith.constant 0 : i32
    return %c0_i32, %c0_i32_0 : i32, i32
  }
  func.func @transform_7(%arg0: i32) -> (i32, i32) {
    %c0_i32 = arith.constant 0 : i32
    %c0_i32_0 = arith.constant 0 : i32
    %c0_i32_1 = arith.constant 0 : i32
    return %c0_i32, %c0_i32_0 : i32, i32
  }
  func.func @transform_8(%arg0: i32) -> (i32, i32) {
    %c0_i32 = arith.constant 0 : i32
    %c0_i32_0 = arith.constant 0 : i32
    %c0_i32_1 = arith.constant 0 : i32
    return %c0_i32, %c0_i32_0 : i32, i32
  }
  func.func @transform_9(%arg0: i32) -> (i32, i32) {
    %c0_i32 = arith.constant 0 : i32
    %c0_i32_0 = arith.constant 0 : i32
    return %arg0, %c0_i32 : i32, i32
  }
}

</mosaic_0001>

<llo_original>
// kernel: tpu_custom_call.1
$region0: #{tpu_custom_call.1}
  #allocation0 [shape = 'u32[]', space=smem, size = 0x4, offset = 0x4, fixed_abs, tag = 'smem constant byte address 0x4 - core index']
  #allocation1 [shape = 'u32[144,128]{1,0:T(1,128)}', space=vmem, size = 0x12000, scoped, tag = 'internal scratch']
  %s0 = inlined_call_operand.vmem [shape: f32[64,32], index: 0, kind: input, shape index: {}]
  %s1 = inlined_call_operand.vmem [shape: bf16[32,128], index: 1, kind: input, shape index: {}]
  %s2 = inlined_call_operand.vmem [shape: f32[1,128], index: 2, kind: input, shape index: {}]
  %s3 = inlined_call_operand.vmem [shape: bf16[128,128], index: 3, kind: input, shape index: {}]
  %s4 = inlined_call_operand.vmem [shape: f32[1,128], index: 4, kind: input, shape index: {}]
  %s5 = inlined_call_operand.vmem [shape: bf16[128,128], index: 5, kind: input, shape index: {}]
  %s6 = inlined_call_operand.vmem [shape: f32[1,128], index: 6, kind: input, shape index: {}]
  %s7 = inlined_call_operand.vmem [shape: bf16[128,8], index: 7, kind: input, shape index: {}]
  %s8 = inlined_call_operand.vmem [shape: f32[1,8], index: 8, kind: input, shape index: {}]
  %s9 = inlined_call_operand.vmem [shape: f32[64,8], index: 9, kind: output, shape index: {}]
  %s10 = sld [smem:[#allocation0]]
  $region46: #{tpu_custom_call.1} parent=0
    _
  %s12 = ssub.s32 1, %s10
  %s13 = scalar_select 0, %s12, %s10
  // Predicated region
  $region2: #{tpu_custom_call.1} parent=0 // pred_check
    _
  $region3: #{tpu_custom_call.1} parent=0 // pred_check_branch
    %15 = sbr.rel (0) target = $region5
  $region4: #{tpu_custom_call.1} parent=0 // pred_region
    _
  $region5: #{tpu_custom_call.1} parent=0 // pred_fallthru
    _
  // Predicated region
  $region6: #{tpu_custom_call.1} parent=0 // pred_check
    _
  $region7: #{tpu_custom_call.1} parent=0 // pred_check_branch
    %17 = sbr.rel (0) target = $region9
  $region8: #{tpu_custom_call.1} parent=0 // pred_region
    _
  $region9: #{tpu_custom_call.1} parent=0 // pred_fallthru
    _
  // Predicated region
  $region10: #{tpu_custom_call.1} parent=0 // pred_check
    _
  $region11: #{tpu_custom_call.1} parent=0 // pred_check_branch
    %19 = sbr.rel (0) target = $region13
  $region12: #{tpu_custom_call.1} parent=0 // pred_region
    _
  $region13: #{tpu_custom_call.1} parent=0 // pred_fallthru
    _
  // Predicated region
  $region14: #{tpu_custom_call.1} parent=0 // pred_check
    _
  $region15: #{tpu_custom_call.1} parent=0 // pred_check_branch
    %21 = sbr.rel (0) target = $region17
  $region16: #{tpu_custom_call.1} parent=0 // pred_region
    _
  $region17: #{tpu_custom_call.1} parent=0 // pred_fallthru
    _
  // Predicated region
  $region18: #{tpu_custom_call.1} parent=0 // pred_check
    _
  $region19: #{tpu_custom_call.1} parent=0 // pred_check_branch
    %23 = sbr.rel (0) target = $region21
  $region20: #{tpu_custom_call.1} parent=0 // pred_region
    _
  $region21: #{tpu_custom_call.1} parent=0 // pred_fallthru
    _
  // Predicated region
  $region22: #{tpu_custom_call.1} parent=0 // pred_check
    _
  $region23: #{tpu_custom_call.1} parent=0 // pred_check_branch
    %25 = sbr.rel (0) target = $region25
  $region24: #{tpu_custom_call.1} parent=0 // pred_region
    _
  $region25: #{tpu_custom_call.1} parent=0 // pred_fallthru
    _
  // Predicated region
  $region26: #{tpu_custom_call.1} parent=0 // pred_check
    _
  $region27: #{tpu_custom_call.1} parent=0 // pred_check_branch
    %27 = sbr.rel (0) target = $region29
  $region28: #{tpu_custom_call.1} parent=0 // pred_region
    _
  $region29: #{tpu_custom_call.1} parent=0 // pred_fallthru
    _
  // Predicated region
  $region30: #{tpu_custom_call.1} parent=0 // pred_check
    _
  $region31: #{tpu_custom_call.1} parent=0 // pred_check_branch
    %29 = sbr.rel (0) target = $region33
  $region32: #{tpu_custom_call.1} parent=0 // pred_region
    _
  $region33: #{tpu_custom_call.1} parent=0 // pred_fallthru
    _
  // Predicated region
  $region34: #{tpu_custom_call.1} parent=0 // pred_check
    _
  $region35: #{tpu_custom_call.1} parent=0 // pred_check_branch
    %31 = sbr.rel (0) target = $region37
  $region36: #{tpu_custom_call.1} parent=0 // pred_region
    _
  $region37: #{tpu_custom_call.1} parent=0 // pred_fallthru
    _
  %v33 = vld [vmem:[%s0] sm:$0xff]
  %v34 = vld [vmem:[%s0 + $0x8] sm:$0xff]
  %v35 = vld [vmem:[%s0 + $0x10] sm:$0xff]
  %v36 = vld [vmem:[%s0 + $0x18] sm:$0xff]
  %v37 = vld [vmem:[%s0 + $0x20] sm:$0xff]
  %v38 = vld [vmem:[%s0 + $0x28] sm:$0xff]
  %v39 = vld [vmem:[%s0 + $0x30] sm:$0xff]
  %v40 = vld [vmem:[%s0 + $0x38] sm:$0xff]
  %v41 = vpack.c.bf16 %v34, %v33
  %v42 = vpack.c.bf16 %v36, %v35
  %v43 = vpack.c.bf16 %v38, %v37
  %v44 = vpack.c.bf16 %v40, %v39
  %v45 = vld [vmem:[%s1] sm:$0xf]
  %v46 = vld [vmem:[%s1 + $0x4] sm:$0xf]
  %v47 = vld [vmem:[%s1 + $0x8] sm:$0xf]
  %v48 = vld [vmem:[%s1 + $0xc] sm:$0xf]
  %v49 = vld [vmem:[%s2] sm:$0x1]
  %v51 = vlaneseq
  %v52 = vshrl.u32 %v51, 7
  %v53 = vsub.s32 0, %v52
  %v54 = vrot.slane %v49, %v53
  %v60 = vunpack.c.l.b16 %v45
  %v61 = vunpack.c.l.b16 %v46
  %v62 = vunpack.c.l.b16 %v47
  %v63 = vunpack.c.l.b16 %v48
  %v64 = vpack.c.b16 %v61, %v60
  %v65 = vpack.c.b16 %v63, %v62
  %vm68 = vcmask 261120
  %v70 = vsel %vm68, %v41, 0
  %v73 = vsel %vm68, %v42, 0
  %v76 = vsel %vm68, %v43, 0
  %v79 = vsel %vm68, %v44, 0
  %81 = vmatprep.subr.bf16.mxu0 0
  %82 = vmatpush1.bf16.msra.mxu0 0
  %83 = vmatprep.subr.bf16.mxu0 0
  %84 = vmatpush1.bf16.msra.mxu0 0
  %85 = vmatprep.subr.bf16.mxu0 0
  %86 = vmatpush1.bf16.msra.mxu0 0
  %87 = vmatprep.subr.bf16.mxu0 0
  %88 = vmatpush1.bf16.msra.mxu0 0
  %89 = vmatprep.subr.bf16.mxu0 0
  %90 = vmatpush1.bf16.msra.mxu0 0
  %91 = vmatprep.subr.bf16.mxu0 0
  %92 = vmatpush1.bf16.msra.mxu0 0
  %93 = vmatprep.subr.bf16.mxu0 0
  %94 = vmatpush1.bf16.msra.mxu0 %v65
  %95 = vmatprep.subr.bf16.mxu0 0
  %96 = vmatpush1.bf16.msra.mxu0 %v64
  %97 = vmatprep.subr.bf16.mxu0 0
  %98 = vmatpush2.bf16.msra.mxu0 0
  %99 = vmatprep.subr.bf16.mxu0 0
  %100 = vmatpush2.bf16.msra.mxu0 0
  %101 = vmatprep.subr.bf16.mxu0 0
  %102 = vmatpush2.bf16.msra.mxu0 0
  %103 = vmatprep.subr.bf16.mxu0 0
  %104 = vmatpush2.bf16.msra.mxu0 0
  %105 = vmatprep.subr.bf16.mxu0 0
  %106 = vmatpush2.bf16.msra.mxu0 0
  %107 = vmatprep.subr.bf16.mxu0 0
  %108 = vmatpush2.bf16.msra.mxu0 0
  %109 = vmatprep.subr.bf16.mxu0 0
  %110 = vmatpush2.bf16.msra.mxu0 0
  %111 = vmatprep.subr.bf16.mxu0 0
  %112 = vmatpush2.bf16.msra.mxu0 0
  %113 = vmatprep.mubr.bf16.mxu0 0
  %114 = vmatmul.mubr.bf16.gmra.mxu0 %v70
  %v115 = vpop.f32.mrf.mxu0
  %v116 = vadd.f32 %v54, %v115
  %v117 = vpop.f32.mrf.mxu0
  %v118 = vpop.f32.mrf.mxu0
  %v119 = vadd.f32 %v54, %v118
  %v120 = vpop.f32.mrf.mxu0
  %121 = vmatprep.mubr.bf16.mxu0 0
  %122 = vmatmul.mubr.bf16.gmra.mxu0 %v73
  %v123 = vpop.f32.mrf.mxu0
  %v124 = vadd.f32 %v54, %v123
  %v125 = vpop.f32.mrf.mxu0
  %v126 = vpop.f32.mrf.mxu0
  %v127 = vadd.f32 %v54, %v126
  %v128 = vpop.f32.mrf.mxu0
  %129 = vmatprep.mubr.bf16.mxu0 0
  %130 = vmatmul.mubr.bf16.gmra.mxu0 %v76
  %v131 = vpop.f32.mrf.mxu0
  %v132 = vadd.f32 %v54, %v131
  %v133 = vpop.f32.mrf.mxu0
  %v134 = vpop.f32.mrf.mxu0
  %v135 = vadd.f32 %v54, %v134
  %v136 = vpop.f32.mrf.mxu0
  %137 = vmatprep.mubr.bf16.mxu0 0
  %138 = vmatmul.mubr.bf16.gmra.mxu0 %v79
  %v139 = vpop.f32.mrf.mxu0
  %v140 = vadd.f32 %v54, %v139
  %v141 = vpop.f32.mrf.mxu0
  %v142 = vpop.f32.mrf.mxu0
  %v143 = vadd.f32 %v54, %v142
  %v144 = vpop.f32.mrf.mxu0
  %145 = vdwg.mxu0
  %v146 = vpack.c.bf16 %v119, %v116
  %v147 = vpack.c.bf16 %v127, %v124
  %v148 = vpack.c.bf16 %v135, %v132
  %v149 = vpack.c.bf16 %v143, %v140
  %v150 = vld [vmem:[%s3] sm:$0xf]
  %v151 = vld [vmem:[%s3 + $0x4] sm:$0xf]
  %v152 = vld [vmem:[%s3 + $0x8] sm:$0xf]
  %v153 = vld [vmem:[%s3 + $0xc] sm:$0xf]
  %v154 = vld [vmem:[%s3 + $0x10] sm:$0xf]
  %v155 = vld [vmem:[%s3 + $0x14] sm:$0xf]
  %v156 = vld [vmem:[%s3 + $0x18] sm:$0xf]
  %v157 = vld [vmem:[%s3 + $0x1c] sm:$0xf]
  %v158 = vld [vmem:[%s3 + $0x20] sm:$0xf]
  %v159 = vld [vmem:[%s3 + $0x24] sm:$0xf]
  %v160 = vld [vmem:[%s3 + $0x28] sm:$0xf]
  %v161 = vld [vmem:[%s3 + $0x2c] sm:$0xf]
  %v162 = vld [vmem:[%s3 + $0x30] sm:$0xf]
  %v163 = vld [vmem:[%s3 + $0x34] sm:$0xf]
  %v164 = vld [vmem:[%s3 + $0x38] sm:$0xf]
  %v165 = vld [vmem:[%s3 + $0x3c] sm:$0xf]
  %v166 = vld [vmem:[%s4] sm:$0x1]
  %v168 = vlaneseq
  %v169 = vshrl.u32 %v168, 7
  %v170 = vsub.s32 0, %v169
  %v171 = vrot.slane %v166, %v170
  %v189 = vunpack.c.l.b16 %v150
  %v190 = vunpack.c.l.b16 %v151
  %v191 = vunpack.c.l.b16 %v152
  %v192 = vunpack.c.l.b16 %v153
  %v193 = vunpack.c.l.b16 %v154
  %v194 = vunpack.c.l.b16 %v155
  %v195 = vunpack.c.l.b16 %v156
  %v196 = vunpack.c.l.b16 %v157
  %v197 = vunpack.c.l.b16 %v158
  %v198 = vunpack.c.l.b16 %v159
  %v199 = vunpack.c.l.b16 %v160
  %v200 = vunpack.c.l.b16 %v161
  %v201 = vunpack.c.l.b16 %v162
  %v202 = vunpack.c.l.b16 %v163
  %v203 = vunpack.c.l.b16 %v164
  %v204 = vunpack.c.l.b16 %v165
  %v205 = vpack.c.b16 %v190, %v189
  %v206 = vpack.c.b16 %v192, %v191
  %v207 = vpack.c.b16 %v194, %v193
  %v208 = vpack.c.b16 %v196, %v195
  %v209 = vpack.c.b16 %v198, %v197
  %v210 = vpack.c.b16 %v200, %v199
  %v211 = vpack.c.b16 %v202, %v201
  %v212 = vpack.c.b16 %v204, %v203
  %221 = vmatprep.subr.bf16.mxu0 0
  %222 = vmatpush1.bf16.msra.mxu0 %v212
  %223 = vmatprep.subr.bf16.mxu0 0
  %224 = vmatpush1.bf16.msra.mxu0 %v211
  %225 = vmatprep.subr.bf16.mxu0 0
  %226 = vmatpush1.bf16.msra.mxu0 %v210
  %227 = vmatprep.subr.bf16.mxu0 0
  %228 = vmatpush1.bf16.msra.mxu0 %v209
  %229 = vmatprep.subr.bf16.mxu0 0
  %230 = vmatpush1.bf16.msra.mxu0 %v208
  %231 = vmatprep.subr.bf16.mxu0 0
  %232 = vmatpush1.bf16.msra.mxu0 %v207
  %233 = vmatprep.subr.bf16.mxu0 0
  %234 = vmatpush1.bf16.msra.mxu0 %v206
  %235 = vmatprep.subr.bf16.mxu0 0
  %236 = vmatpush1.bf16.msra.mxu0 %v205
  %237 = vmatprep.subr.bf16.mxu0 0
  %238 = vmatpush2.bf16.msra.mxu0 0
  %239 = vmatprep.subr.bf16.mxu0 0
  %240 = vmatpush2.bf16.msra.mxu0 0
  %241 = vmatprep.subr.bf16.mxu0 0
  %242 = vmatpush2.bf16.msra.mxu0 0
  %243 = vmatprep.subr.bf16.mxu0 0
  %244 = vmatpush2.bf16.msra.mxu0 0
  %245 = vmatprep.subr.bf16.mxu0 0
  %246 = vmatpush2.bf16.msra.mxu0 0
  %247 = vmatprep.subr.bf16.mxu0 0
  %248 = vmatpush2.bf16.msra.mxu0 0
  %249 = vmatprep.subr.bf16.mxu0 0
  %250 = vmatpush2.bf16.msra.mxu0 0
  %251 = vmatprep.subr.bf16.mxu0 0
  %252 = vmatpush2.bf16.msra.mxu0 0
  %253 = vmatprep.mubr.bf16.mxu0 0
  %254 = vmatmul.mubr.bf16.gmra.mxu0 %v146
  %v255 = vpop.f32.mrf.mxu0
  %v256 = vadd.f32 %v171, %v255
  %v257 = vpop.f32.mrf.mxu0
  %v258 = vpop.f32.mrf.mxu0
  %v259 = vadd.f32 %v171, %v258
  %v260 = vpop.f32.mrf.mxu0
  %261 = vmatprep.mubr.bf16.mxu0 0
  %262 = vmatmul.mubr.bf16.gmra.mxu0 %v147
  %v263 = vpop.f32.mrf.mxu0
  %v264 = vadd.f32 %v171, %v263
  %v265 = vpop.f32.mrf.mxu0
  %v266 = vpop.f32.mrf.mxu0
  %v267 = vadd.f32 %v171, %v266
  %v268 = vpop.f32.mrf.mxu0
  %269 = vmatprep.mubr.bf16.mxu0 0
  %270 = vmatmul.mubr.bf16.gmra.mxu0 %v148
  %v271 = vpop.f32.mrf.mxu0
  %v272 = vadd.f32 %v171, %v271
  %v273 = vpop.f32.mrf.mxu0
  %v274 = vpop.f32.mrf.mxu0
  %v275 = vadd.f32 %v171, %v274
  %v276 = vpop.f32.mrf.mxu0
  %277 = vmatprep.mubr.bf16.mxu0 0
  %278 = vmatmul.mubr.bf16.gmra.mxu0 %v149
  %v279 = vpop.f32.mrf.mxu0
  %v280 = vadd.f32 %v171, %v279
  %v281 = vpop.f32.mrf.mxu0
  %v282 = vpop.f32.mrf.mxu0
  %v283 = vadd.f32 %v171, %v282
  %v284 = vpop.f32.mrf.mxu0
  %285 = vdwg.mxu0
  %v286 = vmax.f32 %v256, 0.0
  %v287 = vmax.f32 %v259, 0.0
  %v288 = vmax.f32 %v264, 0.0
  %v289 = vmax.f32 %v267, 0.0
  %v290 = vmax.f32 %v272, 0.0
  %v291 = vmax.f32 %v275, 0.0
  %v292 = vmax.f32 %v280, 0.0
  %v293 = vmax.f32 %v283, 0.0
  %v294 = vpack.c.bf16 %v287, %v286
  %v295 = vpack.c.bf16 %v289, %v288
  %v296 = vpack.c.bf16 %v291, %v290
  %v297 = vpack.c.bf16 %v293, %v292
  %v298 = vld [vmem:[%s5] sm:$0xf]
  %v299 = vld [vmem:[%s5 + $0x4] sm:$0xf]
  %v300 = vld [vmem:[%s5 + $0x8] sm:$0xf]
  %v301 = vld [vmem:[%s5 + $0xc] sm:$0xf]
  %v302 = vld [vmem:[%s5 + $0x10] sm:$0xf]
  %v303 = vld [vmem:[%s5 + $0x14] sm:$0xf]
  %v304 = vld [vmem:[%s5 + $0x18] sm:$0xf]
  %v305 = vld [vmem:[%s5 + $0x1c] sm:$0xf]
  %v306 = vld [vmem:[%s5 + $0x20] sm:$0xf]
  %v307 = vld [vmem:[%s5 + $0x24] sm:$0xf]
  %v308 = vld [vmem:[%s5 + $0x28] sm:$0xf]
  %v309 = vld [vmem:[%s5 + $0x2c] sm:$0xf]
  %v310 = vld [vmem:[%s5 + $0x30] sm:$0xf]
  %v311 = vld [vmem:[%s5 + $0x34] sm:$0xf]
  %v312 = vld [vmem:[%s5 + $0x38] sm:$0xf]
  %v313 = vld [vmem:[%s5 + $0x3c] sm:$0xf]
  %v314 = vld [vmem:[%s6] sm:$0x1]
  %v316 = vlaneseq
  %v317 = vshrl.u32 %v316, 7
  %v318 = vsub.s32 0, %v317
  %v319 = vrot.slane %v314, %v318
  %v337 = vunpack.c.l.b16 %v298
  %v338 = vunpack.c.l.b16 %v299
  %v339 = vunpack.c.l.b16 %v300
  %v340 = vunpack.c.l.b16 %v301
  %v341 = vunpack.c.l.b16 %v302
  %v342 = vunpack.c.l.b16 %v303
  %v343 = vunpack.c.l.b16 %v304
  %v344 = vunpack.c.l.b16 %v305
  %v345 = vunpack.c.l.b16 %v306
  %v346 = vunpack.c.l.b16 %v307
  %v347 = vunpack.c.l.b16 %v308
  %v348 = vunpack.c.l.b16 %v309
  %v349 = vunpack.c.l.b16 %v310
  %v350 = vunpack.c.l.b16 %v311
  %v351 = vunpack.c.l.b16 %v312
  %v352 = vunpack.c.l.b16 %v313
  %v353 = vpack.c.b16 %v338, %v337
  %v354 = vpack.c.b16 %v340, %v339
  %v355 = vpack.c.b16 %v342, %v341
  %v356 = vpack.c.b16 %v344, %v343
  %v357 = vpack.c.b16 %v346, %v345
  %v358 = vpack.c.b16 %v348, %v347
  %v359 = vpack.c.b16 %v350, %v349
  %v360 = vpack.c.b16 %v352, %v351
  %369 = vmatprep.subr.bf16.mxu0 0
  %370 = vmatpush1.bf16.msra.mxu0 %v360
  %371 = vmatprep.subr.bf16.mxu0 0
  %372 = vmatpush1.bf16.msra.mxu0 %v359
  %373 = vmatprep.subr.bf16.mxu0 0
  %374 = vmatpush1.bf16.msra.mxu0 %v358
  %375 = vmatprep.subr.bf16.mxu0 0
  %376 = vmatpush1.bf16.msra.mxu0 %v357
  %377 = vmatprep.subr.bf16.mxu0 0
  %378 = vmatpush1.bf16.msra.mxu0 %v356
  %379 = vmatprep.subr.bf16.mxu0 0
  %380 = vmatpush1.bf16.msra.mxu0 %v355
  %381 = vmatprep.subr.bf16.mxu0 0
  %382 = vmatpush1.bf16.msra.mxu0 %v354
  %383 = vmatprep.subr.bf16.mxu0 0
  %384 = vmatpush1.bf16.msra.mxu0 %v353
  %385 = vmatprep.subr.bf16.mxu0 0
  %386 = vmatpush2.bf16.msra.mxu0 0
  %387 = vmatprep.subr.bf16.mxu0 0
  %388 = vmatpush2.bf16.msra.mxu0 0
  %389 = vmatprep.subr.bf16.mxu0 0
  %390 = vmatpush2.bf16.msra.mxu0 0
  %391 = vmatprep.subr.bf16.mxu0 0
  %392 = vmatpush2.bf16.msra.mxu0 0
  %393 = vmatprep.subr.bf16.mxu0 0
  %394 = vmatpush2.bf16.msra.mxu0 0
  %395 = vmatprep.subr.bf16.mxu0 0
  %396 = vmatpush2.bf16.msra.mxu0 0
  %397 = vmatprep.subr.bf16.mxu0 0
  %398 = vmatpush2.bf16.msra.mxu0 0
  %399 = vmatprep.subr.bf16.mxu0 0
  %400 = vmatpush2.bf16.msra.mxu0 0
  %401 = vmatprep.mubr.bf16.mxu0 0
  %402 = vmatmul.mubr.bf16.gmra.mxu0 %v294
  %v403 = vpop.f32.mrf.mxu0
  %v404 = vadd.f32 %v319, %v403
  %v405 = vpop.f32.mrf.mxu0
  %v406 = vpop.f32.mrf.mxu0
  %v407 = vadd.f32 %v319, %v406
  %v408 = vpop.f32.mrf.mxu0
  %409 = vmatprep.mubr.bf16.mxu0 0
  %410 = vmatmul.mubr.bf16.gmra.mxu0 %v295
  %v411 = vpop.f32.mrf.mxu0
  %v412 = vadd.f32 %v319, %v411
  %v413 = vpop.f32.mrf.mxu0
  %v414 = vpop.f32.mrf.mxu0
  %v415 = vadd.f32 %v319, %v414
  %v416 = vpop.f32.mrf.mxu0
  %417 = vmatprep.mubr.bf16.mxu0 0
  %418 = vmatmul.mubr.bf16.gmra.mxu0 %v296
  %v419 = vpop.f32.mrf.mxu0
  %v420 = vadd.f32 %v319, %v419
  %v421 = vpop.f32.mrf.mxu0
  %v422 = vpop.f32.mrf.mxu0
  %v423 = vadd.f32 %v319, %v422
  %v424 = vpop.f32.mrf.mxu0
  %425 = vmatprep.mubr.bf16.mxu0 0
  %426 = vmatmul.mubr.bf16.gmra.mxu0 %v297
  %v427 = vpop.f32.mrf.mxu0
  %v428 = vadd.f32 %v319, %v427
  %v429 = vpop.f32.mrf.mxu0
  %v430 = vpop.f32.mrf.mxu0
  %v431 = vadd.f32 %v319, %v430
  %v432 = vpop.f32.mrf.mxu0
  %433 = vdwg.mxu0
  %v434 = vmax.f32 %v404, 0.0
  %v435 = vmax.f32 %v407, 0.0
  %v436 = vmax.f32 %v412, 0.0
  %v437 = vmax.f32 %v415, 0.0
  %v438 = vmax.f32 %v420, 0.0
  %v439 = vmax.f32 %v423, 0.0
  %v440 = vmax.f32 %v428, 0.0
  %v441 = vmax.f32 %v431, 0.0
  %v442 = vpack.c.bf16 %v435, %v434
  %v443 = vpack.c.bf16 %v437, %v436
  %v444 = vpack.c.bf16 %v439, %v438
  %v445 = vpack.c.bf16 %v441, %v440
  %v446 = vld [vmem:[%s7] sm:$0xf]
  %v447 = vld [vmem:[%s7 + $0x4] sm:$0xf]
  %v448 = vld [vmem:[%s7 + $0x8] sm:$0xf]
  %v449 = vld [vmem:[%s7 + $0xc] sm:$0xf]
  %v450 = vld [vmem:[%s7 + $0x10] sm:$0xf]
  %v451 = vld [vmem:[%s7 + $0x14] sm:$0xf]
  %v452 = vld [vmem:[%s7 + $0x18] sm:$0xf]
  %v453 = vld [vmem:[%s7 + $0x1c] sm:$0xf]
  %v454 = vld [vmem:[%s7 + $0x20] sm:$0xf]
  %v455 = vld [vmem:[%s7 + $0x24] sm:$0xf]
  %v456 = vld [vmem:[%s7 + $0x28] sm:$0xf]
  %v457 = vld [vmem:[%s7 + $0x2c] sm:$0xf]
  %v458 = vld [vmem:[%s7 + $0x30] sm:$0xf]
  %v459 = vld [vmem:[%s7 + $0x34] sm:$0xf]
  %v460 = vld [vmem:[%s7 + $0x38] sm:$0xf]
  %v461 = vld [vmem:[%s7 + $0x3c] sm:$0xf]
  %v462 = vld [vmem:[%s8] sm:$0x1]
  %v464 = vlaneseq
  %v465 = vshrl.u32 %v464, 7
  %v466 = vsub.s32 0, %v465
  %v467 = vrot.slane %v462, %v466
  %v485 = vunpack.c.l.b16 %v446
  %v486 = vunpack.c.l.b16 %v447
  %v487 = vunpack.c.l.b16 %v448
  %v488 = vunpack.c.l.b16 %v449
  %v489 = vunpack.c.l.b16 %v450
  %v490 = vunpack.c.l.b16 %v451
  %v491 = vunpack.c.l.b16 %v452
  %v492 = vunpack.c.l.b16 %v453
  %v493 = vunpack.c.l.b16 %v454
  %v494 = vunpack.c.l.b16 %v455
  %v495 = vunpack.c.l.b16 %v456
  %v496 = vunpack.c.l.b16 %v457
  %v497 = vunpack.c.l.b16 %v458
  %v498 = vunpack.c.l.b16 %v459
  %v499 = vunpack.c.l.b16 %v460
  %v500 = vunpack.c.l.b16 %v461
  %v501 = vpack.c.b16 %v486, %v485
  %v502 = vpack.c.b16 %v488, %v487
  %v503 = vpack.c.b16 %v490, %v489
  %v504 = vpack.c.b16 %v492, %v491
  %v505 = vpack.c.b16 %v494, %v493
  %v506 = vpack.c.b16 %v496, %v495
  %v507 = vpack.c.b16 %v498, %v497
  %v508 = vpack.c.b16 %v500, %v499
  %517 = vmatprep.subr.bf16.mxu0 0
  %518 = vmatpush1.bf16.msra.mxu0 %v508
  %519 = vmatprep.subr.bf16.mxu0 0
  %520 = vmatpush1.bf16.msra.mxu0 %v507
  %521 = vmatprep.subr.bf16.mxu0 0
  %522 = vmatpush1.bf16.msra.mxu0 %v506
  %523 = vmatprep.subr.bf16.mxu0 0
  %524 = vmatpush1.bf16.msra.mxu0 %v505
  %525 = vmatprep.subr.bf16.mxu0 0
  %526 = vmatpush1.bf16.msra.mxu0 %v504
  %527 = vmatprep.subr.bf16.mxu0 0
  %528 = vmatpush1.bf16.msra.mxu0 %v503
  %529 = vmatprep.subr.bf16.mxu0 0
  %530 = vmatpush1.bf16.msra.mxu0 %v502
  %531 = vmatprep.subr.bf16.mxu0 0
  %532 = vmatpush1.bf16.msra.mxu0 %v501
  %533 = vmatprep.subr.bf16.mxu0 0
  %534 = vmatpush2.bf16.msra.mxu0 0
  %535 = vmatprep.subr.bf16.mxu0 0
  %536 = vmatpush2.bf16.msra.mxu0 0
  %537 = vmatprep.subr.bf16.mxu0 0
  %538 = vmatpush2.bf16.msra.mxu0 0
  %539 = vmatprep.subr.bf16.mxu0 0
  %540 = vmatpush2.bf16.msra.mxu0 0
  %541 = vmatprep.subr.bf16.mxu0 0
  %542 = vmatpush2.bf16.msra.mxu0 0
  %543 = vmatprep.subr.bf16.mxu0 0
  %544 = vmatpush2.bf16.msra.mxu0 0
  %545 = vmatprep.subr.bf16.mxu0 0
  %546 = vmatpush2.bf16.msra.mxu0 0
  %547 = vmatprep.subr.bf16.mxu0 0
  %548 = vmatpush2.bf16.msra.mxu0 0
  %549 = vmatprep.mubr.bf16.mxu0 0
  %550 = vmatmul.mubr.bf16.gmra.mxu0 %v442
  %v551 = vpop.f32.mrf.mxu0
  %v552 = vadd.f32 %v467, %v551
  %v553 = vpop.f32.mrf.mxu0
  %v554 = vpop.f32.mrf.mxu0
  %v555 = vadd.f32 %v467, %v554
  %v556 = vpop.f32.mrf.mxu0
  %557 = vmatprep.mubr.bf16.mxu0 0
  %558 = vmatmul.mubr.bf16.gmra.mxu0 %v443
  %v559 = vpop.f32.mrf.mxu0
  %v560 = vadd.f32 %v467, %v559
  %v561 = vpop.f32.mrf.mxu0
  %v562 = vpop.f32.mrf.mxu0
  %v563 = vadd.f32 %v467, %v562
  %v564 = vpop.f32.mrf.mxu0
  %565 = vmatprep.mubr.bf16.mxu0 0
  %566 = vmatmul.mubr.bf16.gmra.mxu0 %v444
  %v567 = vpop.f32.mrf.mxu0
  %v568 = vadd.f32 %v467, %v567
  %v569 = vpop.f32.mrf.mxu0
  %v570 = vpop.f32.mrf.mxu0
  %v571 = vadd.f32 %v467, %v570
  %v572 = vpop.f32.mrf.mxu0
  %573 = vmatprep.mubr.bf16.mxu0 0
  %574 = vmatmul.mubr.bf16.gmra.mxu0 %v445
  %v575 = vpop.f32.mrf.mxu0
  %v576 = vadd.f32 %v467, %v575
  %v577 = vpop.f32.mrf.mxu0
  %v578 = vpop.f32.mrf.mxu0
  %v579 = vadd.f32 %v467, %v578
  %v580 = vpop.f32.mrf.mxu0
  %581 = vdwg.mxu0
  %vm582 = vcmask 64512
  %583 = vst.msk [vmem:[%s9] sm:$0xff] %vm582, %v552
  %584 = vst.msk [vmem:[%s9 + $0x8] sm:$0xff] %vm582, %v555
  %585 = vst.msk [vmem:[%s9 + $0x10] sm:$0xff] %vm582, %v560
  %586 = vst.msk [vmem:[%s9 + $0x18] sm:$0xff] %vm582, %v563
  %587 = vst.msk [vmem:[%s9 + $0x20] sm:$0xff] %vm582, %v568
  %588 = vst.msk [vmem:[%s9 + $0x28] sm:$0xff] %vm582, %v571
  %589 = vst.msk [vmem:[%s9 + $0x30] sm:$0xff] %vm582, %v576
  %590 = vst.msk [vmem:[%s9 + $0x38] sm:$0xff] %vm582, %v579
  // Predicated region
  $region38: #{tpu_custom_call.1} parent=0 // pred_check
    _
  $region39: #{tpu_custom_call.1} parent=0 // pred_check_branch
    %592 = sbr.rel (0) target = $region41
  $region40: #{tpu_custom_call.1} parent=0 // pred_region
    _
  $region41: #{tpu_custom_call.1} parent=0 // pred_fallthru
    _
  // Predicated region
  $region42: #{tpu_custom_call.1} parent=0 // pred_check
    _
  $region43: #{tpu_custom_call.1} parent=0 // pred_check_branch
    %594 = sbr.rel (0) target = $region45
  $region44: #{tpu_custom_call.1} parent=0 // pred_region
    _
  $region45: #{tpu_custom_call.1} parent=0 // pred_fallthru
    _

</llo_original>
